<compile_context>
chip_gen: v7x
topology: tpu7x:2x2x1
jax: 0.10.0
libtpu: 0.0.40
codegen_flags: <defaults>
</compile_context>

<pallas_src>
import functools

import jax
import jax.numpy as jnp
from jax.experimental import pallas as pl
from jax.experimental.pallas import tpu as pltpu


def _bce_partial_kernel(x_ref, t_ref, o_ref, *, rows, tr, cols, needs_mask):
    """One row-tile: stable BCE-with-logits, folded to an (8, cols) f32 partial sum."""
    x = x_ref[...].astype(jnp.float32)
    t = t_ref[...].astype(jnp.float32)
    # Numerically stable BCEWithLogits (matches torch.nn.BCEWithLogitsLoss):
    #   max(x, 0) - x * t + log1p(exp(-|x|))
    loss = jnp.maximum(x, 0.0) - x * t + jnp.log1p(jnp.exp(-jnp.abs(x)))

    if needs_mask:
        # Zero out rows past the true end of the array (ragged last tile / padded block).
        i = pl.program_id(0)
        row_ids = i * tr + jax.lax.broadcasted_iota(jnp.int32, (tr, cols), 0)
        loss = jnp.where(row_ids < rows, loss, 0.0)

    # VPU-only fold: (tr, cols) -> (tr//8, 8, cols) -> sum over leading axis.
    # Keeps XLU cross-lane reduces and lane-sparse scalar stores off the per-tile path.
    partial = jnp.sum(loss.reshape(tr // 8, 8, cols), axis=0)
    o_ref[...] = partial.reshape(1, 8, cols)


def _choose_row_tile(rows, cols, x_dtype, t_dtype):
    """Largest row tile (multiple of 8) whose double-buffered inputs fit ~8 MiB of VMEM."""
    bytes_per_row = cols * (jnp.dtype(x_dtype).itemsize + jnp.dtype(t_dtype).itemsize)
    budget = 8 * 1024 * 1024                       # conservative across v5e/v6e/v7x
    tr = budget // (2 * max(bytes_per_row, 1))     # 2 = double buffering
    tr = max(8, min(int(tr), 4096))
    tr -= tr % 8
    rows_padded = ((rows + 7) // 8) * 8
    tr = min(tr, rows_padded)                      # don't over-allocate for small inputs
    return max(tr, 8)


def multilabel_task_relevancy_bce_loss(inputs: jax.Array, target: jax.Array,
                                       *, row_tile: int | None = None) -> jax.Array:
    """BCEWithLogitsLoss(reduction='mean') computed with a row-tiled Pallas TPU kernel."""
    assert inputs.shape == target.shape, "input/target shape mismatch"

    # Flatten to 2D; keep the last (label) dim on the lane axis.
    if inputs.ndim == 1:
        x2d = inputs.reshape(1, -1)
        t2d = target.reshape(1, -1)
    else:
        x2d = inputs.reshape(-1, inputs.shape[-1])
        t2d = target.reshape(-1, target.shape[-1])

    rows, cols = x2d.shape
    tr = row_tile if row_tile is not None else _choose_row_tile(rows, cols, x2d.dtype, t2d.dtype)
    tr = max(8, tr - (tr % 8))                     # block rows must be a multiple of 8
    num_blocks = (rows + tr - 1) // tr
    needs_mask = (rows % tr) != 0

    kernel = functools.partial(
        _bce_partial_kernel, rows=rows, tr=tr, cols=cols, needs_mask=needs_mask)

    partials = pl.pallas_call(
        kernel,
        out_shape=jax.ShapeDtypeStruct((num_blocks, 8, cols), jnp.float32),
        grid=(num_blocks,),
        in_specs=[
            pl.BlockSpec((tr, cols), lambda i: (i, 0)),
            pl.BlockSpec((tr, cols), lambda i: (i, 0)),
        ],
        out_specs=pl.BlockSpec((1, 8, cols), lambda i: (i, 0, 0)),
        compiler_params=pltpu.CompilerParams(
            dimension_semantics=("parallel",),     # independent blocks -> megacore on v7x
            vmem_limit_bytes=32 * 1024 * 1024,
        ),
    )(x2d, t2d)

    # Tiny epilogue: final cross-lane/sublane sum + multiply by precomputed 1/N.
    inv_n = jnp.float32(1.0 / float(rows * cols))
    return jnp.sum(partials, dtype=jnp.float32) * inv_n


def _reference(inputs, target):
    x = inputs.astype(jnp.float32)
    t = target.astype(jnp.float32)
    loss = jnp.maximum(x, 0.0) - x * t + jnp.log1p(jnp.exp(-jnp.abs(x)))
    return jnp.mean(loss)


if __name__ == "__main__":
    key = jax.random.PRNGKey(0)

    # Case 1: f32 logits, bf16 {0,1} targets (bf16 halves target HBM traffic, exact values).
    k1, k2, k3, k4, k5, k6 = jax.random.split(key, 6)
    batch, num_labels = 16, 128
    logits1 = jax.random.normal(k1, (batch, num_labels), dtype=jnp.float32)
    targets1 = (jax.random.uniform(k2, (batch, num_labels)) > 0.5).astype(jnp.bfloat16)
    out1 = jax.block_until_ready(multilabel_task_relevancy_bce_loss(logits1, targets1))
    ref1 = _reference(logits1, targets1)
    assert jnp.allclose(out1, ref1, rtol=1e-5, atol=1e-5), (out1, ref1)

    # Case 2: ragged rows (not a multiple of 8) -> in-kernel mask path, single block.
    logits2 = jax.random.normal(k3, (13, 96), dtype=jnp.float32)
    targets2 = (jax.random.uniform(k4, (13, 96)) > 0.5).astype(jnp.float32)
    out2 = jax.block_until_ready(multilabel_task_relevancy_bce_loss(logits2, targets2))
    ref2 = _reference(logits2, targets2)
    assert jnp.allclose(out2, ref2, rtol=1e-5, atol=1e-5), (out2, ref2)

    # Case 3: bf16 logits + targets, forced small row tile -> multi-block grid + ragged last tile.
    logits3 = jax.random.normal(k5, (40, 64), dtype=jnp.float32).astype(jnp.bfloat16)
    targets3 = (jax.random.uniform(k6, (40, 64)) > 0.5).astype(jnp.bfloat16)
    out3 = jax.block_until_ready(
        multilabel_task_relevancy_bce_loss(logits3, targets3, row_tile=16))
    ref3 = _reference(logits3, targets3)
    assert jnp.allclose(out3, ref3, rtol=1e-5, atol=1e-5), (out3, ref3)

    print("KERNEL_OK")
</pallas_src>

<mosaic_0001>
module attributes {stable_mosaic.version = 11 : i64} {
  func.func @_bce_partial_kernel(%arg0: i32, %arg1: memref<16x128xf32, #tpu.memory_space<vmem>>, %arg2: memref<16x128xbf16, #tpu.memory_space<vmem>>, %arg3: memref<1x8x128xf32, #tpu.memory_space<vmem>>) attributes {dimension_semantics = [#tpu.dimension_semantics<parallel>], iteration_bounds = array<i64: 1>, scalar_prefetch = 0 : i64, scratch_operands = 0 : i64, tpu.core_type = #tpu.core_type<tc>, window_params = [{transform_indices = @transform_0, window_bounds = array<i64: 16, 128>}, {transform_indices = @transform_1, window_bounds = array<i64: 16, 128>}, {transform_indices = @transform_2, window_bounds = array<i64: 1, 8, 128>}]} {
    %c0 = arith.constant 0 : index
    %c0_0 = arith.constant 0 : index
    %0 = vector.load %arg1[%c0, %c0_0] : memref<16x128xf32, #tpu.memory_space<vmem>>, vector<16x128xf32>
    %c0_1 = arith.constant 0 : index
    %c0_2 = arith.constant 0 : index
    %1 = vector.load %arg2[%c0_1, %c0_2] : memref<16x128xbf16, #tpu.memory_space<vmem>>, vector<16x128xbf16>
    %2 = arith.extf %1 : vector<16x128xbf16> to vector<16x128xf32>
    %cst = arith.constant 0.000000e+00 : f32
    %3 = vector.broadcast %cst : f32 to vector<16x128xf32>
    %4 = arith.maximumf %0, %3 : vector<16x128xf32>
    %5 = arith.mulf %0, %2 : vector<16x128xf32>
    %6 = arith.subf %4, %5 : vector<16x128xf32>
    %7 = math.absf %0 : vector<16x128xf32>
    %cst_3 = arith.constant 0.000000e+00 : f32
    %8 = vector.broadcast %cst_3 : f32 to vector<16x128xf32>
    %9 = arith.subf %8, %7 : vector<16x128xf32>
    %10 = math.exp %9 : vector<16x128xf32>
    %11 = math.log1p %10 : vector<16x128xf32>
    %12 = arith.addf %6, %11 : vector<16x128xf32>
    %13 = vector.shape_cast %12 : vector<16x128xf32> to vector<2x8x128xf32>
    %cst_4 = arith.constant dense<0.000000e+00> : vector<8x128xf32>
    %14 = vector.multi_reduction <add>, %13, %cst_4 [0] : vector<2x8x128xf32> to vector<8x128xf32>
    %15 = vector.shape_cast %14 : vector<8x128xf32> to vector<1x8x128xf32>
    %c0_5 = arith.constant 0 : index
    %c0_6 = arith.constant 0 : index
    %c0_7 = arith.constant 0 : index
    %16 = vector.load %arg3[%c0_5, %c0_6, %c0_7] : memref<1x8x128xf32, #tpu.memory_space<vmem>>, vector<1x8x128xf32>
    tpu.vector_store %arg3[%c0_5, %c0_6, %c0_7], %15 {strides = array<i32>} : memref<1x8x128xf32, #tpu.memory_space<vmem>>, vector<1x8x128xf32>,
    return
  }
  func.func @transform_0(%arg0: i32) -> (i32, i32) {
    %c0_i32 = arith.constant 0 : i32
    %c0_i32_0 = arith.constant 0 : i32
    return %arg0, %c0_i32 : i32, i32
  }
  func.func @transform_1(%arg0: i32) -> (i32, i32) {
    %c0_i32 = arith.constant 0 : i32
    %c0_i32_0 = arith.constant 0 : i32
    return %arg0, %c0_i32 : i32, i32
  }
  func.func @transform_2(%arg0: i32) -> (i32, i32, i32) {
    %c0_i32 = arith.constant 0 : i32
    %c0_i32_0 = arith.constant 0 : i32
    %c0_i32_1 = arith.constant 0 : i32
    return %arg0, %c0_i32, %c0_i32_0 : i32, i32, i32
  }
}

</mosaic_0001>

<llo_original>
// kernel: tpu_custom_call.1
$region0: #{tpu_custom_call.1}
  #allocation0 [shape = 'u32[]', space=smem, size = 0x4, offset = 0x4, fixed_abs, tag = 'smem constant byte address 0x4 - core index']
  #allocation1 [shape = 'u32[144,128]{1,0:T(1,128)}', space=vmem, size = 0x12000, scoped, tag = 'internal scratch']
  %s0 = inlined_call_operand.hbm [shape: f32[16,128], index: 0, kind: input, shape index: {}]
  %s1 = inlined_call_operand.hbm [shape: bf16[16,128], index: 1, kind: input, shape index: {}]
  %s2 = inlined_call_operand.hbm [shape: f32[1,8,128], index: 2, kind: output, shape index: {}]
  %s3 = sld [smem:[#allocation0]]
  $region26: #{tpu_custom_call.1} parent=0
    _
  %s5 = ssub.s32 1, %s3
  %s6 = scalar_select 0, %s5, %s3
  $region1: #{tpu_custom_call.1} parent=0
    #allocation2 [shape = 'u8[8192]{0}', space=vmem, size = 0x2000, scoped, tag = 'input window, operand 0, single buffered']
    #allocation3 [shape = 's32[1]{0}', space=sflag, size = 0x4, scoped, tag = 'scoped memory for tpu_custom_call.1']
    #allocation4 [shape = 's32[1]{0}', space=sflag, size = 0x4, scoped, tag = 'scoped memory for tpu_custom_call.1']
    #allocation5 [shape = 'u8[4096]{0}', space=vmem, size = 0x1000, scoped, tag = 'input window, operand 1, single buffered']
    #allocation6 [shape = 's32[1]{0}', space=sflag, size = 0x4, scoped, tag = 'scoped memory for tpu_custom_call.1']
    #allocation7 [shape = 'u8[4096]{0}', space=vmem, size = 0x1000, scoped, tag = 'output window, operand 0, single buffered']
    %7 = vsyncpa [#allocation3], 0
    %8 = vsyncpa [#allocation6], 0
    %9 = vsyncpa [#allocation4], 0
    // Predicated region
    $region2: #{tpu_custom_call.1} parent=1 // pred_check
      _
    $region3: #{tpu_custom_call.1} parent=1 // pred_check_branch
      %11 = sbr.rel (0) target = $region5
    $region4: #{tpu_custom_call.1} parent=1 // pred_region
      %s13 = ssub.s32 256, 256
      %14 = vsyncadd [#allocation3], %s13
      %s15 = sshll.u32 [#allocation2], 4
      %s16 = int_to_ptr.vmem [resolvable:$true] %s15
      %21 = dma.hbm_to_vmem [thread:$0]  %s0, 256, %s16, [#allocation3], 128, 128, 8
    $region5: #{tpu_custom_call.1} parent=1 // pred_fallthru
      _
    // Predicated region
    $region6: #{tpu_custom_call.1} parent=1 // pred_check
      _
    $region7: #{tpu_custom_call.1} parent=1 // pred_check_branch
      %23 = sbr.rel (0) target = $region9
    $region8: #{tpu_custom_call.1} parent=1 // pred_region
      %s25 = ssub.s32 128, 128
      %26 = vsyncadd [#allocation6], %s25
      %s27 = sshll.u32 [#allocation5], 4
      %s28 = int_to_ptr.vmem [resolvable:$true] %s27
      %33 = dma.hbm_to_vmem [thread:$0]  %s1, 128, %s28, [#allocation6], 64, 64, 4
    $region9: #{tpu_custom_call.1} parent=1 // pred_fallthru
      _
    // Predicated region
    $region10: #{tpu_custom_call.1} parent=1 // pred_check
      _
    $region11: #{tpu_custom_call.1} parent=1 // pred_check_branch
      %35 = sbr.rel (0) target = $region13
    $region12: #{tpu_custom_call.1} parent=1 // pred_region
      %36 = dma.done [#allocation3], 256
    $region13: #{tpu_custom_call.1} parent=1 // pred_fallthru
      _
    // Predicated region
    $region14: #{tpu_custom_call.1} parent=1 // pred_check
      _
    $region15: #{tpu_custom_call.1} parent=1 // pred_check_branch
      %38 = sbr.rel (0) target = $region17
    $region16: #{tpu_custom_call.1} parent=1 // pred_region
      %39 = dma.done [#allocation6], 128
    $region17: #{tpu_custom_call.1} parent=1 // pred_fallthru
      _
    %v40 = vld [vmem:[#allocation2] sm:$0xff]
    %v41 = vld [vmem:[#allocation2 + $0x8] sm:$0xff]
    %v42 = vld [vmem:[#allocation5] sm:$0xf]
    %v43 = vld [vmem:[#allocation5 + $0x4] sm:$0xf]
    %v44 = vunpack.c.l.bf16 %v42
    %v45 = vunpack.c.l.bf16 %v43
    %v46 = vmax.f32 %v40, 0.0
    %v47 = vmax.f32 %v41, 0.0
    %v48 = vmul.f32 %v40, %v44
    %v49 = vmul.f32 %v41, %v45
    %v50 = vsub.f32 %v46, %v48
    %v51 = vsub.f32 %v47, %v49
    %v52 = vand.u32 2147483647, %v40
    %v53 = vand.u32 2147483647, %v41
    %v54 = vsub.f32 0.0, %v52
    %v55 = vsub.f32 0.0, %v53
    %v56 = vmul.f32 %v54, 1.442695
    %v57 = vpow.pop %v56
    %v58 = vmul.f32 %v55, 1.442695
    %v59 = vpow.pop %v58
    %v60 = vadd.f32 %v57, 1.0
    %v61 = vlog2.pop %v60
    %v62 = vmul.f32 %v61, 0.6931472
    %v63 = vmul.f32 -0.5, %v57
    %v64 = vadd.f32 %v63, 1.0
    %v65 = vmul.f32 %v64, %v57
    %v66 = vand.u32 2147483647, %v57
    %vm67 = vcmp.lt.f32.partialorder %v66, 0.0004427343
    %v68 = vsel %vm67, %v65, %v62
    %v69 = vadd.f32 %v59, 1.0
    %v70 = vlog2.pop %v69
    %v71 = vmul.f32 %v70, 0.6931472
    %v72 = vmul.f32 -0.5, %v59
    %v73 = vadd.f32 %v72, 1.0
    %v74 = vmul.f32 %v73, %v59
    %v75 = vand.u32 2147483647, %v59
    %vm76 = vcmp.lt.f32.partialorder %v75, 0.0004427343
    %v77 = vsel %vm76, %v74, %v71
    %v78 = vadd.f32 %v50, %v68
    %v79 = vadd.f32 %v51, %v77
    %v80 = vadd.f32 %v78, %v79
    %81 = vst [vmem:[#allocation7] sm:$0xff] %v80
    // Predicated region
    $region18: #{tpu_custom_call.1} parent=1 // pred_check
      _
    $region19: #{tpu_custom_call.1} parent=1 // pred_check_branch
      %83 = sbr.rel (0) target = $region21
    $region20: #{tpu_custom_call.1} parent=1 // pred_region
      %s85 = ssub.s32 128, 128
      %86 = vsyncadd [#allocation4], %s85
      %s88 = sshll.u32 [#allocation7], 4
      %s89 = int_to_ptr.vmem [resolvable:$true] %s88
      %91 = dma.vmem_to_hbm [thread:$0]  %s89, 128, %s2, [#allocation4]
    $region21: #{tpu_custom_call.1} parent=1 // pred_fallthru
      _
    // Predicated region
    $region22: #{tpu_custom_call.1} parent=1 // pred_check
      _
    $region23: #{tpu_custom_call.1} parent=1 // pred_check_branch
      %93 = sbr.rel (0) target = $region25
    $region24: #{tpu_custom_call.1} parent=1 // pred_region
      %94 = dma.done [#allocation4], 128
    $region25: #{tpu_custom_call.1} parent=1 // pred_fallthru
      _
    %95 = vsyncpa [#allocation3], 1
    %96 = vsyncpa [#allocation6], 1
    %97 = vsyncpa [#allocation4], 1

</llo_original>
